<compile_context>
chip_gen: v5e
topology: v5e:2x2
jax: 0.10.0
libtpu: 0.0.40
codegen_flags: <defaults>
</compile_context>

<pallas_src>
from functools import partial

import numpy as np
import jax
import jax.numpy as jnp
from jax import lax
from jax.experimental import pallas as pl
from jax.experimental.pallas import tpu as pltpu

LAMBDA_COORD = 5.0
LAMBDA_NOOBJ = 0.5
_MAX_TILE_LANES = 1024  # lanes per grid step (x8 sublanes = 8192 cells/step)


def _round_up(x, m):
    return ((x + m - 1) // m) * m


def _yolo_v1_loss_kernel(p_ref, t_ref, out_ref):
    """p_ref/t_ref: (8*D, TILE) f32 VMEM blocks (channel c lives on rows 8c..8c+7).
    out_ref: (1, 8, 128) f32 partial sums for this tile (one loss term / sublane)."""

    def prow(c):  # stream one channel slab (8, TILE) straight from the ref
        return p_ref[8 * c:8 * c + 8, :]

    def trow(c):
        return t_ref[8 * c:8 * c + 8, :]

    has_obj = trow(0) == 1.0

    # ground-truth box (target channels 1..4); reused by both IoU computations.
    tx, ty, tw, th = trow(1), trow(2), trow(3), trow(4)
    gt_area = tw * th
    g_l, g_r = tx - tw * 0.5, tx + tw * 0.5
    g_t, g_b = ty - th * 0.5, ty + th * 0.5

    def iou(bx, by, bw, bh):
        area = bw * bh
        max_left = jnp.maximum(bx - bw * 0.5, g_l)
        min_right = jnp.minimum(bx + bw * 0.5, g_r)
        max_top = jnp.maximum(by - bh * 0.5, g_t)
        min_bottom = jnp.minimum(by + bh * 0.5, g_b)
        invalid = (max_left >= min_right) | (max_top >= min_bottom)
        inter = (min_right - max_left) * (min_bottom - max_top)
        denom = jnp.where(invalid, 1.0, area + gt_area - inter)
        r = pl.reciprocal(denom, approx=True)   # EUP slot (VALU stays free)
        r = r * (2.0 - denom * r)               # one Newton step for accuracy
        return jnp.where(invalid, 0.0, inter * r)

    # branch 1: predicted box 1 (pred channels 1..4) vs gt.
    p1x, p1y, p1w, p1h = prow(1), prow(2), prow(3), prow(4)
    iou1 = iou(p1x, p1y, p1w, p1h)
    cxy1 = (p1x - tx) ** 2 + (p1y - ty) ** 2
    cwh1 = (jnp.sqrt(p1w) - jnp.sqrt(tw)) ** 2 + (jnp.sqrt(p1h) - jnp.sqrt(th)) ** 2

    # branch 2: as in the reference, IoU uses *target* box 2 vs gt, while the
    # coordinate terms use pred box 2 vs target box 2.
    t2x, t2y, t2w, t2h = trow(6), trow(7), trow(8), trow(9)
    iou2 = iou(t2x, t2y, t2w, t2h)
    p2x, p2y, p2w, p2h = prow(6), prow(7), prow(8), prow(9)
    cxy2 = (p2x - t2x) ** 2 + (p2y - t2y) ** 2
    cwh2 = (jnp.sqrt(p2w) - jnp.sqrt(t2w)) ** 2 + (jnp.sqrt(p2h) - jnp.sqrt(t2h)) ** 2

    p0, p5 = prow(0), prow(5)
    obj1 = (p0 - iou1) ** 2
    obj2 = (p5 - iou2) ** 2
    noobj1 = LAMBDA_NOOBJ * p5 * p5
    noobj2 = LAMBDA_NOOBJ * p0 * p0
    noobj_no = noobj1 + noobj2

    # class term: sum over class channels (rows 80.. of the packed slab).
    n_class = p_ref.shape[0] // 8 - 10
    cls = jnp.zeros_like(p0)
    for c in range(n_class):
        d = prow(10 + c) - trow(10 + c)
        cls = cls + d * d

    use1 = iou1 > iou2
    zero = jnp.zeros_like(p0)
    xy_cell = jnp.where(has_obj, LAMBDA_COORD * jnp.where(use1, cxy1, cxy2), zero)
    wh_cell = jnp.where(has_obj, LAMBDA_COORD * jnp.where(use1, cwh1, cwh2), zero)
    obj_cell = jnp.where(has_obj, jnp.where(use1, obj1, obj2), zero)
    noobj_cell = jnp.where(has_obj, jnp.where(use1, noobj1, noobj2), noobj_no)
    cls_cell = jnp.where(has_obj, cls, zero)

    sums = (jnp.sum(xy_cell), jnp.sum(wh_cell), jnp.sum(obj_cell),
            jnp.sum(noobj_cell), jnp.sum(cls_cell))

    # single lane-dense output store: loss term k broadcast across sublane k.
    sub = lax.broadcasted_iota(jnp.int32, out_ref.shape, 1)
    res = jnp.zeros(out_ref.shape, jnp.float32)
    for k, s in enumerate(sums):
        res = jnp.where(sub == k, s, res)
    out_ref[...] = res


@partial(jax.jit, static_argnums=(2, 3, 4))
def yolo_v1_loss(pred, target, S, B, C):
    """Matches YOLOv1Loss.forward:
    returns ((coord_xy+coord_wh)/bs, obj/bs, noobj/bs, class/bs, total/bs)."""
    assert B == 2, "channel indexing in the reference module assumes B == 2"
    D = C + 5 * B
    pred = jnp.asarray(pred, jnp.float32).reshape(-1, S, S, D)
    target = jnp.asarray(target, jnp.float32).reshape(-1, S, S, D)
    batch = pred.shape[0]
    N = batch * S * S

    # lane tiling: N cells -> 8 sublanes x `lanes` lanes, lanes a multiple of TILE.
    lanes_needed = -(-N // 8)
    tile = min(_MAX_TILE_LANES, _round_up(lanes_needed, 128))
    lanes = _round_up(lanes_needed, tile)
    n_pad = 8 * lanes
    num_tiles = lanes // tile

    # Cell-major -> channel-major relayout, done once under jit so XLA fuses the
    # pad + transpose + reshape into a single relayout.  Zero-padded cells
    # contribute exactly 0 to every loss term (t[0]==0 and p==0).
    # TODO(synk): if the upstream network can emit channel-major (and/or bf16)
    # predictions, feed them directly and drop this extra HBM round trip.
    def pack(x):
        x2 = jnp.pad(x.reshape(N, D), ((0, n_pad - N), (0, 0)))
        return x2.T.reshape(8 * D, lanes)  # row 8*d+j = channel d, cell chunk j

    p_pack = pack(pred)
    t_pack = pack(target)

    in_spec = pl.BlockSpec((8 * D, tile), lambda i: (0, i))
    out = pl.pallas_call(
        _yolo_v1_loss_kernel,
        grid=(num_tiles,),
        in_specs=[in_spec, in_spec],
        out_specs=pl.BlockSpec((1, 8, 128), lambda i: (i, 0, 0)),
        out_shape=jax.ShapeDtypeStruct((num_tiles, 8, 128), jnp.float32),
        compiler_params=pltpu.CompilerParams(
            dimension_semantics=("parallel",)),  # shard tiles across TCs on v7x
    )(p_pack, t_pack)

    # tiny final reduction over per-tile partial sums (sublanes 0..4, lane 0).
    sums = jnp.sum(out[:, :, 0], axis=0)
    xy, wh, obj, noobj, cls = sums[0], sums[1], sums[2], sums[3], sums[4]
    total = xy + wh + obj + noobj + cls
    bs = jnp.float32(batch)
    return ((xy + wh) / bs, obj / bs, noobj / bs, cls / bs, total / bs)


def _ref_yolo_v1_loss(pred, target, S, B, C, lc=5.0, ln=0.5):
    """NumPy port of the PyTorch loop (reference for validation)."""
    pred = np.asarray(pred, np.float64).reshape(-1, S, S, C + 5 * B)
    target = np.asarray(target, np.float64).reshape(-1, S, S, C + 5 * B)
    bs = pred.shape[0]

    def iou(b1, b2):
        a1 = b1[2] * b1[3]
        a2 = b2[2] * b2[3]
        ml = max(b1[0] - b1[2] / 2, b2[0] - b2[2] / 2)
        mr = min(b1[0] + b1[2] / 2, b2[0] + b2[2] / 2)
        mt = max(b1[1] - b1[3] / 2, b2[1] - b2[3] / 2)
        mb = min(b1[1] + b1[3] / 2, b2[1] + b2[3] / 2)
        if ml >= mr or mt >= mb:
            return 0.0
        inter = (mr - ml) * (mb - mt)
        return inter / (a1 + a2 - inter)

    xy = wh = obj = noobj = cls = 0.0
    for b in range(bs):
        for y in range(S):
            for x in range(S):
                cp, ct = pred[b, y, x], target[b, y, x]
                if ct[0] == 1:
                    i1 = iou(cp[1:5], ct[1:5])
                    i2 = iou(ct[6:10], ct[1:5])
                    if i1 > i2:
                        xy += lc * np.sum((cp[1:3] - ct[1:3]) ** 2)
                        wh += lc * np.sum((np.sqrt(cp[3:5]) - np.sqrt(ct[3:5])) ** 2)
                        obj += (cp[0] - i1) ** 2
                        noobj += ln * cp[5] ** 2
                    else:
                        xy += lc * np.sum((cp[6:8] - ct[6:8]) ** 2)
                        wh += lc * np.sum((np.sqrt(cp[8:10]) - np.sqrt(ct[8:10])) ** 2)
                        obj += (cp[5] - i2) ** 2
                        noobj += ln * cp[0] ** 2
                    cls += np.sum((cp[10:] - ct[10:]) ** 2)
                else:
                    noobj += ln * (cp[0] ** 2 + cp[5] ** 2)
    total = xy + wh + obj + noobj + cls
    return ((xy + wh) / bs, obj / bs, noobj / bs, cls / bs, total / bs)


if __name__ == "__main__":
    def _make_inputs(key, batch, S, C, B=2):
        D = C + 5 * B
        kp, kt, km = jax.random.split(key, 3)
        # positive values so sqrt() stays finite (same convention as valid YOLO targets)
        pred = jax.random.uniform(kp, (batch, S, S, D), jnp.float32, minval=0.05, maxval=1.0)
        target = jax.random.uniform(kt, (batch, S, S, D), jnp.float32, minval=0.05, maxval=1.0)
        obj_mask = jax.random.bernoulli(km, 0.5, (batch, S, S))
        target = target.at[..., 0].set(jnp.where(obj_mask, 1.0, 0.0))
        return pred, target

    key = jax.random.PRNGKey(0)
    k1, k2 = jax.random.split(key)

    B = 2
    for (batch, S, C), kk in (((2, 4, 4), k1), ((3, 7, 20), k2)):
        pred, target = _make_inputs(kk, batch, S, C, B)
        out = jax.block_until_ready(yolo_v1_loss(pred, target, S, B, C))
        ref = _ref_yolo_v1_loss(np.asarray(pred), np.asarray(target), S, B, C)
        np.testing.assert_allclose(np.array([float(o) for o in out]),
                                   np.array(ref, dtype=np.float64),
                                   rtol=2e-3, atol=2e-3)

    print("KERNEL_OK")
</pallas_src>

<mosaic_0001>
module attributes {stable_mosaic.version = 11 : i64} {
  func.func @_yolo_v1_loss_kernel(%arg0: i32, %arg1: memref<112x128xf32, #tpu.memory_space<vmem>>, %arg2: memref<112x128xf32, #tpu.memory_space<vmem>>, %arg3: memref<1x8x128xf32, #tpu.memory_space<vmem>>) attributes {dimension_semantics = [#tpu.dimension_semantics<parallel>], iteration_bounds = array<i64: 1>, scalar_prefetch = 0 : i64, scratch_operands = 0 : i64, tpu.core_type = #tpu.core_type<tc>, window_params = [{transform_indices = @transform_0, window_bounds = array<i64: 112, 128>}, {transform_indices = @transform_1, window_bounds = array<i64: 112, 128>}, {transform_indices = @transform_2, window_bounds = array<i64: 1, 8, 128>}]} {
    %c0 = arith.constant 0 : index
    %c0_0 = arith.constant 0 : index
    %0 = vector.load %arg2[%c0, %c0_0] : memref<112x128xf32, #tpu.memory_space<vmem>>, vector<8x128xf32>
    %cst = arith.constant 1.000000e+00 : f32
    %1 = vector.broadcast %cst : f32 to vector<8x128xf32>
    %2 = arith.cmpf oeq, %0, %1 : vector<8x128xf32>
    %c8 = arith.constant 8 : index
    %c0_1 = arith.constant 0 : index
    %3 = vector.load %arg2[%c8, %c0_1] : memref<112x128xf32, #tpu.memory_space<vmem>>, vector<8x128xf32>
    %c16 = arith.constant 16 : index
    %c0_2 = arith.constant 0 : index
    %4 = vector.load %arg2[%c16, %c0_2] : memref<112x128xf32, #tpu.memory_space<vmem>>, vector<8x128xf32>
    %c24 = arith.constant 24 : index
    %c0_3 = arith.constant 0 : index
    %5 = vector.load %arg2[%c24, %c0_3] : memref<112x128xf32, #tpu.memory_space<vmem>>, vector<8x128xf32>
    %c32 = arith.constant 32 : index
    %c0_4 = arith.constant 0 : index
    %6 = vector.load %arg2[%c32, %c0_4] : memref<112x128xf32, #tpu.memory_space<vmem>>, vector<8x128xf32>
    %7 = arith.mulf %5, %6 : vector<8x128xf32>
    %cst_5 = arith.constant 5.000000e-01 : f32
    %8 = vector.broadcast %cst_5 : f32 to vector<8x128xf32>
    %9 = arith.mulf %5, %8 : vector<8x128xf32>
    %10 = arith.subf %3, %9 : vector<8x128xf32>
    %cst_6 = arith.constant 5.000000e-01 : f32
    %11 = vector.broadcast %cst_6 : f32 to vector<8x128xf32>
    %12 = arith.mulf %5, %11 : vector<8x128xf32>
    %13 = arith.addf %3, %12 : vector<8x128xf32>
    %cst_7 = arith.constant 5.000000e-01 : f32
    %14 = vector.broadcast %cst_7 : f32 to vector<8x128xf32>
    %15 = arith.mulf %6, %14 : vector<8x128xf32>
    %16 = arith.subf %4, %15 : vector<8x128xf32>
    %cst_8 = arith.constant 5.000000e-01 : f32
    %17 = vector.broadcast %cst_8 : f32 to vector<8x128xf32>
    %18 = arith.mulf %6, %17 : vector<8x128xf32>
    %19 = arith.addf %4, %18 : vector<8x128xf32>
    %c8_9 = arith.constant 8 : index
    %c0_10 = arith.constant 0 : index
    %20 = vector.load %arg1[%c8_9, %c0_10] : memref<112x128xf32, #tpu.memory_space<vmem>>, vector<8x128xf32>
    %c16_11 = arith.constant 16 : index
    %c0_12 = arith.constant 0 : index
    %21 = vector.load %arg1[%c16_11, %c0_12] : memref<112x128xf32, #tpu.memory_space<vmem>>, vector<8x128xf32>
    %c24_13 = arith.constant 24 : index
    %c0_14 = arith.constant 0 : index
    %22 = vector.load %arg1[%c24_13, %c0_14] : memref<112x128xf32, #tpu.memory_space<vmem>>, vector<8x128xf32>
    %c32_15 = arith.constant 32 : index
    %c0_16 = arith.constant 0 : index
    %23 = vector.load %arg1[%c32_15, %c0_16] : memref<112x128xf32, #tpu.memory_space<vmem>>, vector<8x128xf32>
    %24 = arith.mulf %22, %23 : vector<8x128xf32>
    %cst_17 = arith.constant 5.000000e-01 : f32
    %25 = vector.broadcast %cst_17 : f32 to vector<8x128xf32>
    %26 = arith.mulf %22, %25 : vector<8x128xf32>
    %27 = arith.subf %20, %26 : vector<8x128xf32>
    %28 = arith.maximumf %27, %10 : vector<8x128xf32>
    %cst_18 = arith.constant 5.000000e-01 : f32
    %29 = vector.broadcast %cst_18 : f32 to vector<8x128xf32>
    %30 = arith.mulf %22, %29 : vector<8x128xf32>
    %31 = arith.addf %20, %30 : vector<8x128xf32>
    %32 = arith.minimumf %31, %13 : vector<8x128xf32>
    %cst_19 = arith.constant 5.000000e-01 : f32
    %33 = vector.broadcast %cst_19 : f32 to vector<8x128xf32>
    %34 = arith.mulf %23, %33 : vector<8x128xf32>
    %35 = arith.subf %21, %34 : vector<8x128xf32>
    %36 = arith.maximumf %35, %16 : vector<8x128xf32>
    %cst_20 = arith.constant 5.000000e-01 : f32
    %37 = vector.broadcast %cst_20 : f32 to vector<8x128xf32>
    %38 = arith.mulf %23, %37 : vector<8x128xf32>
    %39 = arith.addf %21, %38 : vector<8x128xf32>
    %40 = arith.minimumf %39, %19 : vector<8x128xf32>
    %41 = arith.cmpf oge, %28, %32 : vector<8x128xf32>
    %42 = arith.cmpf oge, %36, %40 : vector<8x128xf32>
    %43 = arith.ori %41, %42 : vector<8x128xi1>
    %44 = arith.subf %32, %28 : vector<8x128xf32>
    %45 = arith.subf %40, %36 : vector<8x128xf32>
    %46 = arith.mulf %44, %45 : vector<8x128xf32>
    %47 = arith.addf %24, %7 : vector<8x128xf32>
    %48 = arith.subf %47, %46 : vector<8x128xf32>
    %cst_21 = arith.constant 1.000000e+00 : f32
    %49 = vector.broadcast %cst_21 : f32 to vector<8x128xf32>
    %50 = arith.select %43, %49, %48 : vector<8x128xi1>, vector<8x128xf32>
    %51 = tpu.reciprocal %50 {approx = true} : vector<8x128xf32> -> vector<8x128xf32>
    %52 = arith.mulf %50, %51 : vector<8x128xf32>
    %cst_22 = arith.constant 2.000000e+00 : f32
    %53 = vector.broadcast %cst_22 : f32 to vector<8x128xf32>
    %54 = arith.subf %53, %52 : vector<8x128xf32>
    %55 = arith.mulf %51, %54 : vector<8x128xf32>
    %56 = arith.mulf %46, %55 : vector<8x128xf32>
    %cst_23 = arith.constant 0.000000e+00 : f32
    %57 = vector.broadcast %cst_23 : f32 to vector<8x128xf32>
    %58 = arith.select %43, %57, %56 : vector<8x128xi1>, vector<8x128xf32>
    %59 = arith.subf %20, %3 : vector<8x128xf32>
    %60 = arith.mulf %59, %59 : vector<8x128xf32>
    %61 = arith.subf %21, %4 : vector<8x128xf32>
    %62 = arith.mulf %61, %61 : vector<8x128xf32>
    %63 = arith.addf %60, %62 : vector<8x128xf32>
    %64 = math.sqrt %22 : vector<8x128xf32>
    %65 = math.sqrt %5 : vector<8x128xf32>
    %66 = arith.subf %64, %65 : vector<8x128xf32>
    %67 = arith.mulf %66, %66 : vector<8x128xf32>
    %68 = math.sqrt %23 : vector<8x128xf32>
    %69 = math.sqrt %6 : vector<8x128xf32>
    %70 = arith.subf %68, %69 : vector<8x128xf32>
    %71 = arith.mulf %70, %70 : vector<8x128xf32>
    %72 = arith.addf %67, %71 : vector<8x128xf32>
    %c48 = arith.constant 48 : index
    %c0_24 = arith.constant 0 : index
    %73 = vector.load %arg2[%c48, %c0_24] : memref<112x128xf32, #tpu.memory_space<vmem>>, vector<8x128xf32>
    %c56 = arith.constant 56 : index
    %c0_25 = arith.constant 0 : index
    %74 = vector.load %arg2[%c56, %c0_25] : memref<112x128xf32, #tpu.memory_space<vmem>>, vector<8x128xf32>
    %c64 = arith.constant 64 : index
    %c0_26 = arith.constant 0 : index
    %75 = vector.load %arg2[%c64, %c0_26] : memref<112x128xf32, #tpu.memory_space<vmem>>, vector<8x128xf32>
    %c72 = arith.constant 72 : index
    %c0_27 = arith.constant 0 : index
    %76 = vector.load %arg2[%c72, %c0_27] : memref<112x128xf32, #tpu.memory_space<vmem>>, vector<8x128xf32>
    %77 = arith.mulf %75, %76 : vector<8x128xf32>
    %cst_28 = arith.constant 5.000000e-01 : f32
    %78 = vector.broadcast %cst_28 : f32 to vector<8x128xf32>
    %79 = arith.mulf %75, %78 : vector<8x128xf32>
    %80 = arith.subf %73, %79 : vector<8x128xf32>
    %81 = arith.maximumf %80, %10 : vector<8x128xf32>
    %cst_29 = arith.constant 5.000000e-01 : f32
    %82 = vector.broadcast %cst_29 : f32 to vector<8x128xf32>
    %83 = arith.mulf %75, %82 : vector<8x128xf32>
    %84 = arith.addf %73, %83 : vector<8x128xf32>
    %85 = arith.minimumf %84, %13 : vector<8x128xf32>
    %cst_30 = arith.constant 5.000000e-01 : f32
    %86 = vector.broadcast %cst_30 : f32 to vector<8x128xf32>
    %87 = arith.mulf %76, %86 : vector<8x128xf32>
    %88 = arith.subf %74, %87 : vector<8x128xf32>
    %89 = arith.maximumf %88, %16 : vector<8x128xf32>
    %cst_31 = arith.constant 5.000000e-01 : f32
    %90 = vector.broadcast %cst_31 : f32 to vector<8x128xf32>
    %91 = arith.mulf %76, %90 : vector<8x128xf32>
    %92 = arith.addf %74, %91 : vector<8x128xf32>
    %93 = arith.minimumf %92, %19 : vector<8x128xf32>
    %94 = arith.cmpf oge, %81, %85 : vector<8x128xf32>
    %95 = arith.cmpf oge, %89, %93 : vector<8x128xf32>
    %96 = arith.ori %94, %95 : vector<8x128xi1>
    %97 = arith.subf %85, %81 : vector<8x128xf32>
    %98 = arith.subf %93, %89 : vector<8x128xf32>
    %99 = arith.mulf %97, %98 : vector<8x128xf32>
    %100 = arith.addf %77, %7 : vector<8x128xf32>
    %101 = arith.subf %100, %99 : vector<8x128xf32>
    %cst_32 = arith.constant 1.000000e+00 : f32
    %102 = vector.broadcast %cst_32 : f32 to vector<8x128xf32>
    %103 = arith.select %96, %102, %101 : vector<8x128xi1>, vector<8x128xf32>
    %104 = tpu.reciprocal %103 {approx = true} : vector<8x128xf32> -> vector<8x128xf32>
    %105 = arith.mulf %103, %104 : vector<8x128xf32>
    %cst_33 = arith.constant 2.000000e+00 : f32
    %106 = vector.broadcast %cst_33 : f32 to vector<8x128xf32>
    %107 = arith.subf %106, %105 : vector<8x128xf32>
    %108 = arith.mulf %104, %107 : vector<8x128xf32>
    %109 = arith.mulf %99, %108 : vector<8x128xf32>
    %cst_34 = arith.constant 0.000000e+00 : f32
    %110 = vector.broadcast %cst_34 : f32 to vector<8x128xf32>
    %111 = arith.select %96, %110, %109 : vector<8x128xi1>, vector<8x128xf32>
    %c48_35 = arith.constant 48 : index
    %c0_36 = arith.constant 0 : index
    %112 = vector.load %arg1[%c48_35, %c0_36] : memref<112x128xf32, #tpu.memory_space<vmem>>, vector<8x128xf32>
    %c56_37 = arith.constant 56 : index
    %c0_38 = arith.constant 0 : index
    %113 = vector.load %arg1[%c56_37, %c0_38] : memref<112x128xf32, #tpu.memory_space<vmem>>, vector<8x128xf32>
    %c64_39 = arith.constant 64 : index
    %c0_40 = arith.constant 0 : index
    %114 = vector.load %arg1[%c64_39, %c0_40] : memref<112x128xf32, #tpu.memory_space<vmem>>, vector<8x128xf32>
    %c72_41 = arith.constant 72 : index
    %c0_42 = arith.constant 0 : index
    %115 = vector.load %arg1[%c72_41, %c0_42] : memref<112x128xf32, #tpu.memory_space<vmem>>, vector<8x128xf32>
    %116 = arith.subf %112, %73 : vector<8x128xf32>
    %117 = arith.mulf %116, %116 : vector<8x128xf32>
    %118 = arith.subf %113, %74 : vector<8x128xf32>
    %119 = arith.mulf %118, %118 : vector<8x128xf32>
    %120 = arith.addf %117, %119 : vector<8x128xf32>
    %121 = math.sqrt %114 : vector<8x128xf32>
    %122 = math.sqrt %75 : vector<8x128xf32>
    %123 = arith.subf %121, %122 : vector<8x128xf32>
    %124 = arith.mulf %123, %123 : vector<8x128xf32>
    %125 = math.sqrt %115 : vector<8x128xf32>
    %126 = math.sqrt %76 : vector<8x128xf32>
    %127 = arith.subf %125, %126 : vector<8x128xf32>
    %128 = arith.mulf %127, %127 : vector<8x128xf32>
    %129 = arith.addf %124, %128 : vector<8x128xf32>
    %c0_43 = arith.constant 0 : index
    %c0_44 = arith.constant 0 : index
    %130 = vector.load %arg1[%c0_43, %c0_44] : memref<112x128xf32, #tpu.memory_space<vmem>>, vector<8x128xf32>
    %c40 = arith.constant 40 : index
    %c0_45 = arith.constant 0 : index
    %131 = vector.load %arg1[%c40, %c0_45] : memref<112x128xf32, #tpu.memory_space<vmem>>, vector<8x128xf32>
    %132 = arith.subf %130, %58 : vector<8x128xf32>
    %133 = arith.mulf %132, %132 : vector<8x128xf32>
    %134 = arith.subf %131, %111 : vector<8x128xf32>
    %135 = arith.mulf %134, %134 : vector<8x128xf32>
    %cst_46 = arith.constant 5.000000e-01 : f32
    %136 = vector.broadcast %cst_46 : f32 to vector<8x128xf32>
    %137 = arith.mulf %136, %131 : vector<8x128xf32>
    %138 = arith.mulf %137, %131 : vector<8x128xf32>
    %cst_47 = arith.constant 5.000000e-01 : f32
    %139 = vector.broadcast %cst_47 : f32 to vector<8x128xf32>
    %140 = arith.mulf %139, %130 : vector<8x128xf32>
    %141 = arith.mulf %140, %130 : vector<8x128xf32>
    %142 = arith.addf %138, %141 : vector<8x128xf32>
    %cst_48 = arith.constant 0.000000e+00 : f32
    %143 = vector.broadcast %cst_48 : f32 to vector<8x128xf32>
    %c80 = arith.constant 80 : index
    %c0_49 = arith.constant 0 : index
    %144 = vector.load %arg1[%c80, %c0_49] : memref<112x128xf32, #tpu.memory_space<vmem>>, vector<8x128xf32>
    %c80_50 = arith.constant 80 : index
    %c0_51 = arith.constant 0 : index
    %145 = vector.load %arg2[%c80_50, %c0_51] : memref<112x128xf32, #tpu.memory_space<vmem>>, vector<8x128xf32>
    %146 = arith.subf %144, %145 : vector<8x128xf32>
    %147 = arith.mulf %146, %146 : vector<8x128xf32>
    %148 = arith.addf %143, %147 : vector<8x128xf32>
    %c88 = arith.constant 88 : index
    %c0_52 = arith.constant 0 : index
    %149 = vector.load %arg1[%c88, %c0_52] : memref<112x128xf32, #tpu.memory_space<vmem>>, vector<8x128xf32>
    %c88_53 = arith.constant 88 : index
    %c0_54 = arith.constant 0 : index
    %150 = vector.load %arg2[%c88_53, %c0_54] : memref<112x128xf32, #tpu.memory_space<vmem>>, vector<8x128xf32>
    %151 = arith.subf %149, %150 : vector<8x128xf32>
    %152 = arith.mulf %151, %151 : vector<8x128xf32>
    %153 = arith.addf %148, %152 : vector<8x128xf32>
    %c96 = arith.constant 96 : index
    %c0_55 = arith.constant 0 : index
    %154 = vector.load %arg1[%c96, %c0_55] : memref<112x128xf32, #tpu.memory_space<vmem>>, vector<8x128xf32>
    %c96_56 = arith.constant 96 : index
    %c0_57 = arith.constant 0 : index
    %155 = vector.load %arg2[%c96_56, %c0_57] : memref<112x128xf32, #tpu.memory_space<vmem>>, vector<8x128xf32>
    %156 = arith.subf %154, %155 : vector<8x128xf32>
    %157 = arith.mulf %156, %156 : vector<8x128xf32>
    %158 = arith.addf %153, %157 : vector<8x128xf32>
    %c104 = arith.constant 104 : index
    %c0_58 = arith.constant 0 : index
    %159 = vector.load %arg1[%c104, %c0_58] : memref<112x128xf32, #tpu.memory_space<vmem>>, vector<8x128xf32>
    %c104_59 = arith.constant 104 : index
    %c0_60 = arith.constant 0 : index
    %160 = vector.load %arg2[%c104_59, %c0_60] : memref<112x128xf32, #tpu.memory_space<vmem>>, vector<8x128xf32>
    %161 = arith.subf %159, %160 : vector<8x128xf32>
    %162 = arith.mulf %161, %161 : vector<8x128xf32>
    %163 = arith.addf %158, %162 : vector<8x128xf32>
    %164 = arith.cmpf ogt, %58, %111 : vector<8x128xf32>
    %cst_61 = arith.constant 0.000000e+00 : f32
    %165 = vector.broadcast %cst_61 : f32 to vector<8x128xf32>
    %166 = arith.select %164, %63, %120 : vector<8x128xi1>, vector<8x128xf32>
    %cst_62 = arith.constant 5.000000e+00 : f32
    %167 = vector.broadcast %cst_62 : f32 to vector<8x128xf32>
    %168 = arith.mulf %167, %166 : vector<8x128xf32>
    %169 = arith.select %2, %168, %165 : vector<8x128xi1>, vector<8x128xf32>
    %170 = arith.select %164, %72, %129 : vector<8x128xi1>, vector<8x128xf32>
    %cst_63 = arith.constant 5.000000e+00 : f32
    %171 = vector.broadcast %cst_63 : f32 to vector<8x128xf32>
    %172 = arith.mulf %171, %170 : vector<8x128xf32>
    %173 = arith.select %2, %172, %165 : vector<8x128xi1>, vector<8x128xf32>
    %174 = arith.select %164, %133, %135 : vector<8x128xi1>, vector<8x128xf32>
    %175 = arith.select %2, %174, %165 : vector<8x128xi1>, vector<8x128xf32>
    %176 = arith.select %164, %138, %141 : vector<8x128xi1>, vector<8x128xf32>
    %177 = arith.select %2, %176, %142 : vector<8x128xi1>, vector<8x128xf32>
    %178 = arith.select %2, %163, %165 : vector<8x128xi1>, vector<8x128xf32>
    %179 = vector.shape_cast %169 : vector<8x128xf32> to vector<1x8x128xf32>
    %cst_64 = arith.constant dense<0.000000e+00> : vector<1xf32>
    %180 = vector.multi_reduction <add>, %179, %cst_64 [1, 2] : vector<1x8x128xf32> to vector<1xf32>
    %181 = vector.shape_cast %180 : vector<1xf32> to vector<1x1x1xf32>
    %182 = vector.extract %181[0, 0, 0] : f32 from vector<1x1x1xf32>
    %183 = vector.shape_cast %173 : vector<8x128xf32> to vector<1x8x128xf32>
    %cst_65 = arith.constant dense<0.000000e+00> : vector<1xf32>
    %184 = vector.multi_reduction <add>, %183, %cst_65 [1, 2] : vector<1x8x128xf32> to vector<1xf32>
    %185 = vector.shape_cast %184 : vector<1xf32> to vector<1x1x1xf32>
    %186 = vector.extract %185[0, 0, 0] : f32 from vector<1x1x1xf32>
    %187 = vector.shape_cast %175 : vector<8x128xf32> to vector<1x8x128xf32>
    %cst_66 = arith.constant dense<0.000000e+00> : vector<1xf32>
    %188 = vector.multi_reduction <add>, %187, %cst_66 [1, 2] : vector<1x8x128xf32> to vector<1xf32>
    %189 = vector.shape_cast %188 : vector<1xf32> to vector<1x1x1xf32>
    %190 = vector.extract %189[0, 0, 0] : f32 from vector<1x1x1xf32>
    %191 = vector.shape_cast %177 : vector<8x128xf32> to vector<1x8x128xf32>
    %cst_67 = arith.constant dense<0.000000e+00> : vector<1xf32>
    %192 = vector.multi_reduction <add>, %191, %cst_67 [1, 2] : vector<1x8x128xf32> to vector<1xf32>
    %193 = vector.shape_cast %192 : vector<1xf32> to vector<1x1x1xf32>
    %194 = vector.extract %193[0, 0, 0] : f32 from vector<1x1x1xf32>
    %195 = vector.shape_cast %178 : vector<8x128xf32> to vector<1x8x128xf32>
    %cst_68 = arith.constant dense<0.000000e+00> : vector<1xf32>
    %196 = vector.multi_reduction <add>, %195, %cst_68 [1, 2] : vector<1x8x128xf32> to vector<1xf32>
    %197 = vector.shape_cast %196 : vector<1xf32> to vector<1x1x1xf32>
    %198 = vector.extract %197[0, 0, 0] : f32 from vector<1x1x1xf32>
    %199 = tpu.iota {dimensions = array<i32: 1>} : vector<1x8x128xi32>
    %cst_69 = arith.constant 0.000000e+00 : f32
    %200 = vector.broadcast %cst_69 : f32 to vector<1x8x128xf32>
    %c0_i32 = arith.constant 0 : i32
    %201 = vector.broadcast %c0_i32 : i32 to vector<1x8x128xi32>
    %202 = arith.cmpi eq, %199, %201 : vector<1x8x128xi32>
    %203 = vector.broadcast %182 : f32 to vector<1x8x128xf32>
    %204 = arith.select %202, %203, %200 : vector<1x8x128xi1>, vector<1x8x128xf32>
    %c1_i32 = arith.constant 1 : i32
    %205 = vector.broadcast %c1_i32 : i32 to vector<1x8x128xi32>
    %206 = arith.cmpi eq, %199, %205 : vector<1x8x128xi32>
    %207 = vector.broadcast %186 : f32 to vector<1x8x128xf32>
    %208 = arith.select %206, %207, %204 : vector<1x8x128xi1>, vector<1x8x128xf32>
    %c2_i32 = arith.constant 2 : i32
    %209 = vector.broadcast %c2_i32 : i32 to vector<1x8x128xi32>
    %210 = arith.cmpi eq, %199, %209 : vector<1x8x128xi32>
    %211 = vector.broadcast %190 : f32 to vector<1x8x128xf32>
    %212 = arith.select %210, %211, %208 : vector<1x8x128xi1>, vector<1x8x128xf32>
    %c3_i32 = arith.constant 3 : i32
    %213 = vector.broadcast %c3_i32 : i32 to vector<1x8x128xi32>
    %214 = arith.cmpi eq, %199, %213 : vector<1x8x128xi32>
    %215 = vector.broadcast %194 : f32 to vector<1x8x128xf32>
    %216 = arith.select %214, %215, %212 : vector<1x8x128xi1>, vector<1x8x128xf32>
    %c4_i32 = arith.constant 4 : i32
    %217 = vector.broadcast %c4_i32 : i32 to vector<1x8x128xi32>
    %218 = arith.cmpi eq, %199, %217 : vector<1x8x128xi32>
    %219 = vector.broadcast %198 : f32 to vector<1x8x128xf32>
    %220 = arith.select %218, %219, %216 : vector<1x8x128xi1>, vector<1x8x128xf32>
    %c0_70 = arith.constant 0 : index
    %c0_71 = arith.constant 0 : index
    %c0_72 = arith.constant 0 : index
    %221 = vector.load %arg3[%c0_70, %c0_71, %c0_72] : memref<1x8x128xf32, #tpu.memory_space<vmem>>, vector<1x8x128xf32>
    tpu.vector_store %arg3[%c0_70, %c0_71, %c0_72], %220 {strides = array<i32>} : memref<1x8x128xf32, #tpu.memory_space<vmem>>, vector<1x8x128xf32>,
    return
  }
  func.func @transform_0(%arg0: i32) -> (i32, i32) {
    %c0_i32 = arith.constant 0 : i32
    %c0_i32_0 = arith.constant 0 : i32
    return %c0_i32, %arg0 : i32, i32
  }
  func.func @transform_1(%arg0: i32) -> (i32, i32) {
    %c0_i32 = arith.constant 0 : i32
    %c0_i32_0 = arith.constant 0 : i32
    return %c0_i32, %arg0 : i32, i32
  }
  func.func @transform_2(%arg0: i32) -> (i32, i32, i32) {
    %c0_i32 = arith.constant 0 : i32
    %c0_i32_0 = arith.constant 0 : i32
    %c0_i32_1 = arith.constant 0 : i32
    return %arg0, %c0_i32, %c0_i32_0 : i32, i32, i32
  }
}

</mosaic_0001>

<llo_original>
// kernel: yolo_v1_loss.1
$region0: #{yolo_v1_loss.1}
  #allocation0 [shape = 'u32[]', space=smem, size = 0x4, offset = 0x4, fixed_abs, tag = 'smem constant byte address 0x4 - core index']
  #allocation1 [shape = 'u32[72,128]{1,0:T(1,128)}', space=vmem, size = 0x9000, scoped, tag = 'internal scratch']
  %s0 = inlined_call_operand.vmem [shape: f32[112,128], index: 0, kind: input, shape index: {}]
  %s1 = inlined_call_operand.vmem [shape: f32[112,128], index: 1, kind: input, shape index: {}]
  %s2 = inlined_call_operand.vmem [shape: f32[1,8,128], index: 2, kind: output, shape index: {}]
  %s3 = sld [smem:[#allocation0]]
  $region18: #{yolo_v1_loss.1} parent=0
    _
  %s5 = ssub.s32 1, %s3
  %s6 = scalar_select 0, %s5, %s3
  // Predicated region
  $region2: #{yolo_v1_loss.1} parent=0 // pred_check
    _
  $region3: #{yolo_v1_loss.1} parent=0 // pred_check_branch
    %8 = sbr.rel (0) target = $region5
  $region4: #{yolo_v1_loss.1} parent=0 // pred_region
    _
  $region5: #{yolo_v1_loss.1} parent=0 // pred_fallthru
    _
  // Predicated region
  $region6: #{yolo_v1_loss.1} parent=0 // pred_check
    _
  $region7: #{yolo_v1_loss.1} parent=0 // pred_check_branch
    %10 = sbr.rel (0) target = $region9
  $region8: #{yolo_v1_loss.1} parent=0 // pred_region
    _
  $region9: #{yolo_v1_loss.1} parent=0 // pred_fallthru
    _
  %v11 = vld [vmem:[%s1] sm:$0xff]
  %vm12 = vcmp.eq.f32.partialorder %v11, 1.0
  %v13 = vld [vmem:[%s1 + $0x8] sm:$0xff]
  %v14 = vld [vmem:[%s1 + $0x10] sm:$0xff]
  %v15 = vld [vmem:[%s1 + $0x18] sm:$0xff]
  %v16 = vld [vmem:[%s1 + $0x20] sm:$0xff]
  %v17 = vmul.f32 %v15, %v16
  %v18 = vmul.f32 %v15, 0.5
  %v19 = vsub.f32 %v13, %v18
  %v20 = vadd.f32 %v13, %v18
  %v21 = vmul.f32 %v16, 0.5
  %v22 = vsub.f32 %v14, %v21
  %v23 = vadd.f32 %v14, %v21
  %v24 = vld [vmem:[%s0 + $0x8] sm:$0xff]
  %v25 = vld [vmem:[%s0 + $0x10] sm:$0xff]
  %v26 = vld [vmem:[%s0 + $0x18] sm:$0xff]
  %v27 = vld [vmem:[%s0 + $0x20] sm:$0xff]
  %v28 = vmul.f32 %v26, %v27
  %v29 = vmul.f32 %v26, 0.5
  %v30 = vsub.f32 %v24, %v29
  %v31 = vmax.f32 %v30, %v19
  %v32 = vadd.f32 %v24, %v29
  %v33 = vmin.f32 %v32, %v20
  %v34 = vmul.f32 %v27, 0.5
  %v35 = vsub.f32 %v25, %v34
  %v36 = vmax.f32 %v35, %v22
  %v37 = vadd.f32 %v25, %v34
  %v38 = vmin.f32 %v37, %v23
  %vm39 = vcmp.ge.f32.partialorder %v31, %v33
  %vm40 = vcmp.ge.f32.partialorder %v36, %v38
  %vm41 = vmor %vm39, %vm40
  %v42 = vsub.f32 %v33, %v31
  %v43 = vsub.f32 %v38, %v36
  %v44 = vmul.f32 %v42, %v43
  %v45 = vadd.f32 %v28, %v17
  %v46 = vsub.f32 %v45, %v44
  %v47 = vsel %vm41, 1.0, %v46
  %v48 = vrcp.pop %v47
  %v49 = vmul.f32 %v47, %v48
  %v50 = vsub.f32 2.0, %v49
  %v51 = vmul.f32 %v48, %v50
  %v52 = vmul.f32 %v44, %v51
  %v53 = vsel %vm41, 0.0, %v52
  %v54 = vsub.f32 %v24, %v13
  %v55 = vmul.f32 %v54, %v54
  %v56 = vsub.f32 %v25, %v14
  %v57 = vmul.f32 %v56, %v56
  %v58 = vadd.f32 %v55, %v57
  %v59 = vrsqrt.pop %v26
  %v60 = vmul.f32 %v59, %v26
  %v61 = vmul.f32 %v60, %v59
  %v62 = vmul.f32 0.5, %v61
  %v63 = vsub.f32 1.5, %v62
  %v64 = vmul.f32 %v59, %v63
  %v65 = vmul.f32 %v26, %v64
  %vm66 = vcmp.eq.f32.partialorder %v26, inf
  %v67 = vsel %vm66, %v26, %v65
  %vm68 = vcmp.eq.f32.partialorder %v26, 0.0
  %v69 = vand.u32 %v26, 2147483648
  %v70 = vsel %vm68, %v69, %v67
  %v71 = vrsqrt.pop %v15
  %v72 = vmul.f32 %v71, %v15
  %v73 = vmul.f32 %v72, %v71
  %v74 = vmul.f32 0.5, %v73
  %v75 = vsub.f32 1.5, %v74
  %v76 = vmul.f32 %v71, %v75
  %v77 = vmul.f32 %v15, %v76
  %vm78 = vcmp.eq.f32.partialorder %v15, inf
  %v79 = vsel %vm78, %v15, %v77
  %vm80 = vcmp.eq.f32.partialorder %v15, 0.0
  %v81 = vand.u32 %v15, 2147483648
  %v82 = vsel %vm80, %v81, %v79
  %v83 = vsub.f32 %v70, %v82
  %v84 = vmul.f32 %v83, %v83
  %v85 = vrsqrt.pop %v27
  %v86 = vmul.f32 %v85, %v27
  %v87 = vmul.f32 %v86, %v85
  %v88 = vmul.f32 0.5, %v87
  %v89 = vsub.f32 1.5, %v88
  %v90 = vmul.f32 %v85, %v89
  %v91 = vmul.f32 %v27, %v90
  %vm92 = vcmp.eq.f32.partialorder %v27, inf
  %v93 = vsel %vm92, %v27, %v91
  %vm94 = vcmp.eq.f32.partialorder %v27, 0.0
  %v95 = vand.u32 %v27, 2147483648
  %v96 = vsel %vm94, %v95, %v93
  %v97 = vrsqrt.pop %v16
  %v98 = vmul.f32 %v97, %v16
  %v99 = vmul.f32 %v98, %v97
  %v100 = vmul.f32 0.5, %v99
  %v101 = vsub.f32 1.5, %v100
  %v102 = vmul.f32 %v97, %v101
  %v103 = vmul.f32 %v16, %v102
  %vm104 = vcmp.eq.f32.partialorder %v16, inf
  %v105 = vsel %vm104, %v16, %v103
  %vm106 = vcmp.eq.f32.partialorder %v16, 0.0
  %v107 = vand.u32 %v16, 2147483648
  %v108 = vsel %vm106, %v107, %v105
  %v109 = vsub.f32 %v96, %v108
  %v110 = vmul.f32 %v109, %v109
  %v111 = vadd.f32 %v84, %v110
  %v112 = vld [vmem:[%s1 + $0x30] sm:$0xff]
  %v113 = vld [vmem:[%s1 + $0x38] sm:$0xff]
  %v114 = vld [vmem:[%s1 + $0x40] sm:$0xff]
  %v115 = vld [vmem:[%s1 + $0x48] sm:$0xff]
  %v116 = vmul.f32 %v114, %v115
  %v117 = vmul.f32 %v114, 0.5
  %v118 = vsub.f32 %v112, %v117
  %v119 = vmax.f32 %v118, %v19
  %v120 = vadd.f32 %v112, %v117
  %v121 = vmin.f32 %v120, %v20
  %v122 = vmul.f32 %v115, 0.5
  %v123 = vsub.f32 %v113, %v122
  %v124 = vmax.f32 %v123, %v22
  %v125 = vadd.f32 %v113, %v122
  %v126 = vmin.f32 %v125, %v23
  %vm127 = vcmp.ge.f32.partialorder %v119, %v121
  %vm128 = vcmp.ge.f32.partialorder %v124, %v126
  %vm129 = vmor %vm127, %vm128
  %v130 = vsub.f32 %v121, %v119
  %v131 = vsub.f32 %v126, %v124
  %v132 = vmul.f32 %v130, %v131
  %v133 = vadd.f32 %v116, %v17
  %v134 = vsub.f32 %v133, %v132
  %v135 = vsel %vm129, 1.0, %v134
  %v136 = vrcp.pop %v135
  %v137 = vmul.f32 %v135, %v136
  %v138 = vsub.f32 2.0, %v137
  %v139 = vmul.f32 %v136, %v138
  %v140 = vmul.f32 %v132, %v139
  %v141 = vsel %vm129, 0.0, %v140
  %v142 = vld [vmem:[%s0 + $0x30] sm:$0xff]
  %v143 = vld [vmem:[%s0 + $0x38] sm:$0xff]
  %v144 = vld [vmem:[%s0 + $0x40] sm:$0xff]
  %v145 = vld [vmem:[%s0 + $0x48] sm:$0xff]
  %v146 = vsub.f32 %v142, %v112
  %v147 = vmul.f32 %v146, %v146
  %v148 = vsub.f32 %v143, %v113
  %v149 = vmul.f32 %v148, %v148
  %v150 = vadd.f32 %v147, %v149
  %v151 = vrsqrt.pop %v144
  %v152 = vmul.f32 %v151, %v144
  %v153 = vmul.f32 %v152, %v151
  %v154 = vmul.f32 0.5, %v153
  %v155 = vsub.f32 1.5, %v154
  %v156 = vmul.f32 %v151, %v155
  %v157 = vmul.f32 %v144, %v156
  %vm158 = vcmp.eq.f32.partialorder %v144, inf
  %v159 = vsel %vm158, %v144, %v157
  %vm160 = vcmp.eq.f32.partialorder %v144, 0.0
  %v161 = vand.u32 %v144, 2147483648
  %v162 = vsel %vm160, %v161, %v159
  %v163 = vrsqrt.pop %v114
  %v164 = vmul.f32 %v163, %v114
  %v165 = vmul.f32 %v164, %v163
  %v166 = vmul.f32 0.5, %v165
  %v167 = vsub.f32 1.5, %v166
  %v168 = vmul.f32 %v163, %v167
  %v169 = vmul.f32 %v114, %v168
  %vm170 = vcmp.eq.f32.partialorder %v114, inf
  %v171 = vsel %vm170, %v114, %v169
  %vm172 = vcmp.eq.f32.partialorder %v114, 0.0
  %v173 = vand.u32 %v114, 2147483648
  %v174 = vsel %vm172, %v173, %v171
  %v175 = vsub.f32 %v162, %v174
  %v176 = vmul.f32 %v175, %v175
  %v177 = vrsqrt.pop %v145
  %v178 = vmul.f32 %v177, %v145
  %v179 = vmul.f32 %v178, %v177
  %v180 = vmul.f32 0.5, %v179
  %v181 = vsub.f32 1.5, %v180
  %v182 = vmul.f32 %v177, %v181
  %v183 = vmul.f32 %v145, %v182
  %vm184 = vcmp.eq.f32.partialorder %v145, inf
  %v185 = vsel %vm184, %v145, %v183
  %vm186 = vcmp.eq.f32.partialorder %v145, 0.0
  %v187 = vand.u32 %v145, 2147483648
  %v188 = vsel %vm186, %v187, %v185
  %v189 = vrsqrt.pop %v115
  %v190 = vmul.f32 %v189, %v115
  %v191 = vmul.f32 %v190, %v189
  %v192 = vmul.f32 0.5, %v191
  %v193 = vsub.f32 1.5, %v192
  %v194 = vmul.f32 %v189, %v193
  %v195 = vmul.f32 %v115, %v194
  %vm196 = vcmp.eq.f32.partialorder %v115, inf
  %v197 = vsel %vm196, %v115, %v195
  %vm198 = vcmp.eq.f32.partialorder %v115, 0.0
  %v199 = vand.u32 %v115, 2147483648
  %v200 = vsel %vm198, %v199, %v197
  %v201 = vsub.f32 %v188, %v200
  %v202 = vmul.f32 %v201, %v201
  %v203 = vadd.f32 %v176, %v202
  %v204 = vld [vmem:[%s0] sm:$0xff]
  %v205 = vld [vmem:[%s0 + $0x28] sm:$0xff]
  %v206 = vsub.f32 %v204, %v53
  %v207 = vmul.f32 %v206, %v206
  %v208 = vsub.f32 %v205, %v141
  %v209 = vmul.f32 %v208, %v208
  %v210 = vmul.f32 %v205, 0.5
  %v211 = vmul.f32 %v210, %v205
  %v212 = vmul.f32 %v204, 0.5
  %v213 = vmul.f32 %v212, %v204
  %v214 = vadd.f32 %v211, %v213
  %v215 = vld [vmem:[%s0 + $0x50] sm:$0xff]
  %v216 = vld [vmem:[%s1 + $0x50] sm:$0xff]
  %v217 = vsub.f32 %v215, %v216
  %v218 = vmul.f32 %v217, %v217
  %v219 = vadd.f32 %v218, 0.0
  %v220 = vld [vmem:[%s0 + $0x58] sm:$0xff]
  %v221 = vld [vmem:[%s1 + $0x58] sm:$0xff]
  %v222 = vsub.f32 %v220, %v221
  %v223 = vmul.f32 %v222, %v222
  %v224 = vadd.f32 %v219, %v223
  %v225 = vld [vmem:[%s0 + $0x60] sm:$0xff]
  %v226 = vld [vmem:[%s1 + $0x60] sm:$0xff]
  %v227 = vsub.f32 %v225, %v226
  %v228 = vmul.f32 %v227, %v227
  %v229 = vadd.f32 %v224, %v228
  %v230 = vld [vmem:[%s0 + $0x68] sm:$0xff]
  %v231 = vld [vmem:[%s1 + $0x68] sm:$0xff]
  %v232 = vsub.f32 %v230, %v231
  %v233 = vmul.f32 %v232, %v232
  %v234 = vadd.f32 %v229, %v233
  %vm235 = vcmp.gt.f32.partialorder %v53, %v141
  %v236 = vsel %vm235, %v58, %v150
  %v237 = vmul.f32 %v236, 5.0
  %v238 = vsel %vm12, %v237, 0.0
  %v239 = vsel %vm235, %v111, %v203
  %v240 = vmul.f32 %v239, 5.0
  %v241 = vsel %vm12, %v240, 0.0
  %v242 = vsel %vm235, %v207, %v209
  %v243 = vsel %vm12, %v242, 0.0
  %v244 = vsel %vm235, %v211, %v213
  %v245 = vsel %vm12, %v244, %v214
  %v246 = vsel %vm12, %v234, 0.0
  %247 = vadd.xlane.f32.xlu0 %v238
  %v248 = vpop.xlane.xlu0 %247
  %v249 = vrot.slane %v248, 4
  %v250 = vadd.f32 %v248, %v249
  %v251 = vrot.slane %v250, 2
  %v252 = vadd.f32 %v250, %v251
  %v253 = vrot.slane %v252, 1
  %v254 = vadd.f32 %v252, %v253
  %s255 = vtos %v254
  %256 = vadd.xlane.f32.xlu0 %v241
  %v257 = vpop.xlane.xlu0 %256
  %v258 = vrot.slane %v257, 4
  %v259 = vadd.f32 %v257, %v258
  %v260 = vrot.slane %v259, 2
  %v261 = vadd.f32 %v259, %v260
  %v262 = vrot.slane %v261, 1
  %v263 = vadd.f32 %v261, %v262
  %s264 = vtos %v263
  %265 = vadd.xlane.f32.xlu0 %v243
  %v266 = vpop.xlane.xlu0 %265
  %v267 = vrot.slane %v266, 4
  %v268 = vadd.f32 %v266, %v267
  %v269 = vrot.slane %v268, 2
  %v270 = vadd.f32 %v268, %v269
  %v271 = vrot.slane %v270, 1
  %v272 = vadd.f32 %v270, %v271
  %s273 = vtos %v272
  %274 = vadd.xlane.f32.xlu0 %v245
  %v275 = vpop.xlane.xlu0 %274
  %v276 = vrot.slane %v275, 4
  %v277 = vadd.f32 %v275, %v276
  %v278 = vrot.slane %v277, 2
  %v279 = vadd.f32 %v277, %v278
  %v280 = vrot.slane %v279, 1
  %v281 = vadd.f32 %v279, %v280
  %s282 = vtos %v281
  %283 = vadd.xlane.f32.xlu0 %v246
  %v284 = vpop.xlane.xlu0 %283
  %v285 = vrot.slane %v284, 4
  %v286 = vadd.f32 %v284, %v285
  %v287 = vrot.slane %v286, 2
  %v288 = vadd.f32 %v286, %v287
  %v289 = vrot.slane %v288, 1
  %v290 = vadd.f32 %v288, %v289
  %s291 = vtos %v290
  %v292 = vlaneseq
  %v293 = vshrl.u32 %v292, 7
  %vm294 = vcmp.eq.s32.totalorder %v293, 0
  %v295 = vstv %s255
  %v296 = vsel %vm294, %v295, 0.0
  %vm297 = vcmp.eq.s32.totalorder %v293, 1
  %v298 = vstv %s264
  %v299 = vsel %vm297, %v298, %v296
  %vm300 = vcmp.eq.s32.totalorder %v293, 2
  %v301 = vstv %s273
  %v302 = vsel %vm300, %v301, %v299
  %vm303 = vcmp.eq.s32.totalorder %v293, 3
  %v304 = vstv %s282
  %v305 = vsel %vm303, %v304, %v302
  %vm306 = vcmp.eq.s32.totalorder %v293, 4
  %v307 = vstv %s291
  %v308 = vsel %vm306, %v307, %v305
  %309 = vst [vmem:[%s2] sm:$0xff] %v308
  // Predicated region
  $region10: #{yolo_v1_loss.1} parent=0 // pred_check
    _
  $region11: #{yolo_v1_loss.1} parent=0 // pred_check_branch
    %311 = sbr.rel (0) target = $region13
  $region12: #{yolo_v1_loss.1} parent=0 // pred_region
    _
  $region13: #{yolo_v1_loss.1} parent=0 // pred_fallthru
    _
  // Predicated region
  $region14: #{yolo_v1_loss.1} parent=0 // pred_check
    _
  $region15: #{yolo_v1_loss.1} parent=0 // pred_check_branch
    %313 = sbr.rel (0) target = $region17
  $region16: #{yolo_v1_loss.1} parent=0 // pred_region
    _
  $region17: #{yolo_v1_loss.1} parent=0 // pred_fallthru
    _

</llo_original>
